<compile_context>
chip_gen: v7x
topology: tpu7x:2x2x1
jax: 0.10.0
libtpu: 0.0.40
codegen_flags: <defaults>
</compile_context>

<pallas_src>
import jax
import jax.numpy as jnp
from jax.experimental import pallas as pl
from jax.experimental.pallas import tpu as pltpu

_TRANS_B = (((1,), (1,)), ((), ()))  # contract last dim of lhs with last dim of rhs


def _attn_kernel(hid_ref, enc_ref, len_ref, wh_ref, we_ref, b_ref, v_ref, out_ref):
    # hid_ref : (bt, 2*de)      concatenated (h, c) rows for this block
    # enc_ref : (bt*S, en)      encoder outputs, batch*seq flattened
    # len_ref : (bt, 1) int32   source lengths
    # wh_ref  : (de, 2*de)      hidden part of attn Linear weight (untransposed)
    # we_ref  : (de, en)        encoder part of attn Linear weight (untransposed)
    # b_ref   : (1, de)         attn Linear bias
    # v_ref   : (1, de)         scoring vector v
    # out_ref : (bt, S)         attention weights
    bt, s = out_ref.shape
    de = v_ref.shape[1]

    # Hidden projection for the whole block, bias folded in: (bt, de).
    h_proj = jax.lax.dot_general(
        hid_ref[...], wh_ref[...], dimension_numbers=_TRANS_B,
        preferred_element_type=jnp.float32) + b_ref[...]

    # Encoder projection, one MXU matmul for all bt*S rows: (bt*S, de).
    e_proj = jax.lax.dot_general(
        enc_ref[...], we_ref[...], dimension_numbers=_TRANS_B,
        preferred_element_type=jnp.float32)

    # energy = tanh(enc_proj + hid_proj + bias), broadcast hidden over S.
    energy = jnp.tanh(e_proj.reshape(bt, s, de) + h_proj[:, None, :])

    # scores = v . energy  -> VPU multiply + cross-lane reduce over de.
    scores = jnp.sum(energy * v_ref[...].astype(jnp.float32), axis=-1)  # (bt, s)

    # Length mask (int compare, no float cast) + masked softmax over S.
    iota = jax.lax.broadcasted_iota(jnp.int32, (bt, s), 1)
    masked = jnp.where(iota < len_ref[...], scores, -jnp.inf)

    m = jnp.max(masked, axis=-1, keepdims=True)
    e = jnp.exp(masked - m)
    denom = jnp.sum(e, axis=-1, keepdims=True)
    out_ref[...] = e * pl.reciprocal(denom, approx=True)


def lstm_decoder_attention(h, c, encoder_output, src_lens, W, bias, v,
                           *, b_tile=8, matmul_dtype=None):
    """h, c: (1, B, de); encoder_output: (B, S, en); src_lens: (B,) int.

    W: (de, 2*de + en) (PyTorch Linear layout), bias: (de,), v: (de,).
    matmul_dtype: optional (e.g. jnp.bfloat16) dtype for the encoder matmul
    inputs (v6e/v7x MXU path); softmax math always stays float32.
    Returns (B, 1, S) float32 attention weights.
    """
    B, S, en = encoder_output.shape
    de = h.shape[-1]

    # Choose a batch tile: whole batch if small, else a sublane-aligned tile.
    if B <= b_tile:
        b_tile = B
    else:
        b_tile = max(8, (b_tile // 8) * 8)
    nb = pl.cdiv(B, b_tile)
    B_pad = nb * b_tile

    hidden_cat = jnp.concatenate([h[0], c[0]], axis=-1)           # (B, 2*de)
    enc2d = encoder_output.reshape(B * S, en)                     # (B*S, en)
    lens = src_lens.astype(jnp.int32).reshape(B, 1)               # (B, 1)

    if B_pad != B:
        pad = B_pad - B
        hidden_cat = jnp.pad(hidden_cat, ((0, pad), (0, 0)))
        enc2d = jnp.pad(enc2d, ((0, pad * S), (0, 0)))
        # Padded rows get full length -> well-defined (uniform) softmax, no NaN.
        lens = jnp.pad(lens, ((0, pad), (0, 0)), constant_values=S)

    # Untransposed weight slices; contraction handled by dot_general trans-B.
    W_h = W[:, : 2 * de]                                          # (de, 2*de)
    W_e = W[:, 2 * de:]                                           # (de, en)
    bias_2d = bias.reshape(1, de)
    v_2d = v.reshape(1, de)

    if matmul_dtype is not None:
        enc2d = enc2d.astype(matmul_dtype)
        W_e = W_e.astype(matmul_dtype)

    grid_spec = pl.GridSpec(
        grid=(nb,),
        in_specs=[
            pl.BlockSpec((b_tile, 2 * de), lambda b: (b, 0)),      # hidden rows
            pl.BlockSpec((b_tile * S, en), lambda b: (b, 0)),      # encoder rows
            pl.BlockSpec((b_tile, 1), lambda b: (b, 0)),           # lengths
            pl.BlockSpec((de, 2 * de), lambda b: (0, 0)),          # W_h (fetched once)
            pl.BlockSpec((de, en), lambda b: (0, 0)),              # W_e (fetched once)
            pl.BlockSpec((1, de), lambda b: (0, 0)),               # bias
            pl.BlockSpec((1, de), lambda b: (0, 0)),               # v
        ],
        out_specs=pl.BlockSpec((b_tile, S), lambda b: (b, 0)),
    )

    out = pl.pallas_call(
        _attn_kernel,
        out_shape=jax.ShapeDtypeStruct((B_pad, S), jnp.float32),
        grid_spec=grid_spec,
        compiler_params=pltpu.CompilerParams(
            dimension_semantics=("parallel",)),
    )(hidden_cat, enc2d, lens, W_h, W_e, bias_2d, v_2d)

    return out[:B].reshape(B, 1, S)


def _reference(h, c, encoder_output, src_lens, W, bias, v):
    # Pure-JAX mirror of the PyTorch forward, for correctness checks.
    B, S, _ = encoder_output.shape
    hid = jnp.concatenate([h[0], c[0]], axis=-1)                  # (B, 2*de)
    hid = jnp.broadcast_to(hid[:, None, :], (B, S, hid.shape[-1]))
    x = jnp.concatenate([hid, encoder_output], axis=-1)
    energy = jnp.tanh(x @ W.T + bias)                             # (B, S, de)
    scores = jnp.einsum("d,bsd->bs", v, energy)                   # (B, S)
    idx = jnp.arange(S, dtype=jnp.float32)[None, :]
    mask = idx < src_lens.astype(jnp.float32)[:, None]
    scores = jnp.where(mask, scores, -jnp.inf)
    return jax.nn.softmax(scores, axis=1)[:, None, :]             # (B, 1, S)


if __name__ == "__main__":
    # Small shapes consistent with the module's forward.
    B, S = 2, 8
    de_hidden, en_hidden = 32, 32

    key = jax.random.PRNGKey(0)
    k_h, k_c, k_enc, k_w, k_b, k_v = jax.random.split(key, 6)

    h = jax.random.normal(k_h, (1, B, de_hidden), dtype=jnp.float32)
    c = jax.random.normal(k_c, (1, B, de_hidden), dtype=jnp.float32)
    encoder_output = jax.random.normal(k_enc, (B, S, en_hidden), dtype=jnp.float32)
    src_lens = jnp.array([5, 8], dtype=jnp.int32)

    in_features = 2 * de_hidden + en_hidden
    W = jax.random.uniform(k_w, (de_hidden, in_features), dtype=jnp.float32,
                           minval=-1.0 / in_features ** 0.5,
                           maxval=1.0 / in_features ** 0.5)
    bias = jax.random.uniform(k_b, (de_hidden,), dtype=jnp.float32,
                              minval=-1.0 / in_features ** 0.5,
                              maxval=1.0 / in_features ** 0.5)
    v = jax.random.normal(k_v, (de_hidden,), dtype=jnp.float32) / de_hidden ** 0.5

    ref = _reference(h, c, encoder_output, src_lens, W, bias, v)

    # 1) float32 path (approx-reciprocal softmax -> tolerance 1e-3).
    out = jax.block_until_ready(
        lstm_decoder_attention(h, c, encoder_output, src_lens, W, bias, v))
    assert out.shape == (B, 1, S)
    assert jnp.allclose(out, ref, atol=1e-3), "f32 kernel mismatch vs reference"
    assert jnp.allclose(jnp.sum(out, axis=-1), 1.0, atol=1e-3)
    assert jnp.all(out[0, 0, 5:] == 0.0), "masked positions must be zero"

    # 2) bf16 encoder-matmul path (v6e/v7x MXU); softmax stays f32.
    out_bf16 = jax.block_until_ready(
        lstm_decoder_attention(h, c, encoder_output, src_lens, W, bias, v,
                               matmul_dtype=jnp.bfloat16))
    assert out_bf16.shape == (B, 1, S)
    assert jnp.allclose(out_bf16, ref, atol=8e-2), "bf16 kernel drifted too far"
    assert jnp.allclose(jnp.sum(out_bf16, axis=-1), 1.0, atol=1e-3)

    # 3) larger batch: exercises multi-step grid, batch padding, b_tile=8 path.
    B2 = 12
    k2 = jax.random.split(jax.random.PRNGKey(1), 4)
    h2 = jax.random.normal(k2[0], (1, B2, de_hidden), dtype=jnp.float32)
    c2 = jax.random.normal(k2[1], (1, B2, de_hidden), dtype=jnp.float32)
    enc2 = jax.random.normal(k2[2], (B2, S, en_hidden), dtype=jnp.float32)
    lens2 = jax.random.randint(k2[3], (B2,), 1, S + 1, dtype=jnp.int32)
    out2 = jax.block_until_ready(
        lstm_decoder_attention(h2, c2, enc2, lens2, W, bias, v, b_tile=8))
    ref2 = _reference(h2, c2, enc2, lens2, W, bias, v)
    assert out2.shape == (B2, 1, S)
    assert jnp.allclose(out2, ref2, atol=1e-3), "batched-grid kernel mismatch"

    # TODO(synk): src_lens == 0 yields a NaN row (0/0), same as the PyTorch
    # softmax-over-all-masked behavior; guard upstream if zero-length sources occur.
    print("KERNEL_OK")
</pallas_src>

<mosaic_0001>
module attributes {stable_mosaic.version = 11 : i64} {
  func.func @_attn_kernel(%arg0: i32, %arg1: memref<2x64xf32, #tpu.memory_space<vmem>>, %arg2: memref<16x32xf32, #tpu.memory_space<vmem>>, %arg3: memref<2x1xi32, #tpu.memory_space<vmem>>, %arg4: memref<32x64xf32, #tpu.memory_space<vmem>>, %arg5: memref<32x32xf32, #tpu.memory_space<vmem>>, %arg6: memref<1x32xf32, #tpu.memory_space<vmem>>, %arg7: memref<1x32xf32, #tpu.memory_space<vmem>>, %arg8: memref<2x8xf32, #tpu.memory_space<vmem>>) attributes {dimension_semantics = [#tpu.dimension_semantics<parallel>], iteration_bounds = array<i64: 1>, scalar_prefetch = 0 : i64, scratch_operands = 0 : i64, tpu.core_type = #tpu.core_type<tc>, window_params = [{transform_indices = @transform_0, window_bounds = array<i64: 2, 64>}, {transform_indices = @transform_1, window_bounds = array<i64: 16, 32>}, {transform_indices = @transform_2, window_bounds = array<i64: 2, 1>}, {pipeline_mode = #tpu.pipeline_mode<synchronous>, transform_indices = @transform_3, window_bounds = array<i64: 32, 64>}, {pipeline_mode = #tpu.pipeline_mode<synchronous>, transform_indices = @transform_4, window_bounds = array<i64: 32, 32>}, {pipeline_mode = #tpu.pipeline_mode<synchronous>, transform_indices = @transform_5, window_bounds = array<i64: 1, 32>}, {pipeline_mode = #tpu.pipeline_mode<synchronous>, transform_indices = @transform_6, window_bounds = array<i64: 1, 32>}, {transform_indices = @transform_7, window_bounds = array<i64: 2, 8>}]} {
    %c0 = arith.constant 0 : index
    %c0_0 = arith.constant 0 : index
    %0 = vector.load %arg1[%c0, %c0_0] : memref<2x64xf32, #tpu.memory_space<vmem>>, vector<2x64xf32>
    %c0_1 = arith.constant 0 : index
    %c0_2 = arith.constant 0 : index
    %1 = vector.load %arg4[%c0_1, %c0_2] : memref<32x64xf32, #tpu.memory_space<vmem>>, vector<32x64xf32>
    %cst = arith.constant dense<0.000000e+00> : vector<2x32xf32>
    %2 = tpu.matmul %0, %1, %cst {dimension_numbers = #tpu.dot_dimension_numbers<[1], [1], [0], [0], [0, 0, 1, 0], [], []>} : vector<2x64xf32>, vector<32x64xf32>, vector<2x32xf32> -> vector<2x32xf32>
    %c0_3 = arith.constant 0 : index
    %c0_4 = arith.constant 0 : index
    %3 = vector.load %arg6[%c0_3, %c0_4] : memref<1x32xf32, #tpu.memory_space<vmem>>, vector<1x32xf32>
    %4 = vector.broadcast %3 : vector<1x32xf32> to vector<2x32xf32>
    %5 = arith.addf %2, %4 : vector<2x32xf32>
    %c0_5 = arith.constant 0 : index
    %c0_6 = arith.constant 0 : index
    %6 = vector.load %arg2[%c0_5, %c0_6] : memref<16x32xf32, #tpu.memory_space<vmem>>, vector<16x32xf32>
    %c0_7 = arith.constant 0 : index
    %c0_8 = arith.constant 0 : index
    %7 = vector.load %arg5[%c0_7, %c0_8] : memref<32x32xf32, #tpu.memory_space<vmem>>, vector<32x32xf32>
    %cst_9 = arith.constant dense<0.000000e+00> : vector<16x32xf32>
    %8 = tpu.matmul %6, %7, %cst_9 {dimension_numbers = #tpu.dot_dimension_numbers<[1], [1], [0], [0], [0, 0, 1, 0], [], []>} : vector<16x32xf32>, vector<32x32xf32>, vector<16x32xf32> -> vector<16x32xf32>
    %9 = vector.shape_cast %8 : vector<16x32xf32> to vector<2x8x32xf32>
    %10 = vector.shape_cast %5 : vector<2x32xf32> to vector<2x1x32xf32>
    %11 = vector.broadcast %10 : vector<2x1x32xf32> to vector<2x8x32xf32>
    %12 = arith.addf %9, %11 : vector<2x8x32xf32>
    %13 = math.tanh %12 : vector<2x8x32xf32>
    %c0_10 = arith.constant 0 : index
    %c0_11 = arith.constant 0 : index
    %14 = vector.load %arg7[%c0_10, %c0_11] : memref<1x32xf32, #tpu.memory_space<vmem>>, vector<1x32xf32>
    %15 = vector.shape_cast %14 : vector<1x32xf32> to vector<1x1x32xf32>
    %16 = vector.broadcast %15 : vector<1x1x32xf32> to vector<2x8x32xf32>
    %17 = arith.mulf %13, %16 : vector<2x8x32xf32>
    %cst_12 = arith.constant dense<0.000000e+00> : vector<2x8xf32>
    %18 = vector.multi_reduction <add>, %17, %cst_12 [2] : vector<2x8x32xf32> to vector<2x8xf32>
    %19 = tpu.iota {dimensions = array<i32: 1>} : vector<2x8xi32>
    %c0_13 = arith.constant 0 : index
    %c0_14 = arith.constant 0 : index
    %20 = vector.load %arg3[%c0_13, %c0_14] : memref<2x1xi32, #tpu.memory_space<vmem>>, vector<2x1xi32>
    %21 = vector.broadcast %20 : vector<2x1xi32> to vector<2x8xi32>
    %22 = arith.cmpi slt, %19, %21 : vector<2x8xi32>
    %cst_15 = arith.constant 0xFF800000 : f32
    %23 = vector.broadcast %cst_15 : f32 to vector<2x8xf32>
    %24 = arith.select %22, %18, %23 : vector<2x8xi1>, vector<2x8xf32>
    %cst_16 = arith.constant dense<0xFF800000> : vector<2xf32>
    %25 = vector.multi_reduction <maximumf>, %24, %cst_16 [1] : vector<2x8xf32> to vector<2xf32>
    %26 = vector.shape_cast %25 : vector<2xf32> to vector<2x1xf32>
    %27 = vector.broadcast %26 : vector<2x1xf32> to vector<2x8xf32>
    %28 = arith.subf %24, %27 : vector<2x8xf32>
    %29 = math.exp %28 : vector<2x8xf32>
    %cst_17 = arith.constant dense<0.000000e+00> : vector<2xf32>
    %30 = vector.multi_reduction <add>, %29, %cst_17 [1] : vector<2x8xf32> to vector<2xf32>
    %31 = vector.shape_cast %30 : vector<2xf32> to vector<2x1xf32>
    %32 = tpu.reciprocal %31 {approx = true} : vector<2x1xf32> -> vector<2x1xf32>
    %33 = vector.broadcast %32 : vector<2x1xf32> to vector<2x8xf32>
    %34 = arith.mulf %29, %33 : vector<2x8xf32>
    %c0_18 = arith.constant 0 : index
    %c0_19 = arith.constant 0 : index
    %35 = vector.load %arg8[%c0_18, %c0_19] : memref<2x8xf32, #tpu.memory_space<vmem>>, vector<2x8xf32>
    tpu.vector_store %arg8[%c0_18, %c0_19], %34 {strides = array<i32>} : memref<2x8xf32, #tpu.memory_space<vmem>>, vector<2x8xf32>,
    return
  }
  func.func @transform_0(%arg0: i32) -> (i32, i32) {
    %c0_i32 = arith.constant 0 : i32
    %c0_i32_0 = arith.constant 0 : i32
    return %arg0, %c0_i32 : i32, i32
  }
  func.func @transform_1(%arg0: i32) -> (i32, i32) {
    %c0_i32 = arith.constant 0 : i32
    %c0_i32_0 = arith.constant 0 : i32
    return %arg0, %c0_i32 : i32, i32
  }
  func.func @transform_2(%arg0: i32) -> (i32, i32) {
    %c0_i32 = arith.constant 0 : i32
    %c0_i32_0 = arith.constant 0 : i32
    return %arg0, %c0_i32 : i32, i32
  }
  func.func @transform_3(%arg0: i32) -> (i32, i32) {
    %c0_i32 = arith.constant 0 : i32
    %c0_i32_0 = arith.constant 0 : i32
    %c0_i32_1 = arith.constant 0 : i32
    return %c0_i32, %c0_i32_0 : i32, i32
  }
  func.func @transform_4(%arg0: i32) -> (i32, i32) {
    %c0_i32 = arith.constant 0 : i32
    %c0_i32_0 = arith.constant 0 : i32
    %c0_i32_1 = arith.constant 0 : i32
    return %c0_i32, %c0_i32_0 : i32, i32
  }
  func.func @transform_5(%arg0: i32) -> (i32, i32) {
    %c0_i32 = arith.constant 0 : i32
    %c0_i32_0 = arith.constant 0 : i32
    %c0_i32_1 = arith.constant 0 : i32
    return %c0_i32, %c0_i32_0 : i32, i32
  }
  func.func @transform_6(%arg0: i32) -> (i32, i32) {
    %c0_i32 = arith.constant 0 : i32
    %c0_i32_0 = arith.constant 0 : i32
    %c0_i32_1 = arith.constant 0 : i32
    return %c0_i32, %c0_i32_0 : i32, i32
  }
  func.func @transform_7(%arg0: i32) -> (i32, i32) {
    %c0_i32 = arith.constant 0 : i32
    %c0_i32_0 = arith.constant 0 : i32
    return %arg0, %c0_i32 : i32, i32
  }
}

</mosaic_0001>

<llo_original>
// kernel: tpu_custom_call.1
$region0: #{tpu_custom_call.1}
  #allocation0 [shape = 'u32[]', space=smem, size = 0x4, offset = 0x4, fixed_abs, tag = 'smem constant byte address 0x4 - core index']
  #allocation1 [shape = 'u32[144,128]{1,0:T(1,128)}', space=vmem, size = 0x12000, scoped, tag = 'internal scratch']
  %s0 = inlined_call_operand.vmem [shape: f32[2,64], index: 0, kind: input, shape index: {}]
  %s1 = inlined_call_operand.hbm [shape: f32[16,32], index: 1, kind: input, shape index: {}]
  %s2 = inlined_call_operand.vmem [shape: s32[2,1], index: 2, kind: input, shape index: {}]
  %s3 = inlined_call_operand.hbm [shape: f32[32,64], index: 3, kind: input, shape index: {}]
  %s4 = inlined_call_operand.hbm [shape: f32[32,32], index: 4, kind: input, shape index: {}]
  %s5 = inlined_call_operand.vmem [shape: f32[1,32], index: 5, kind: input, shape index: {}]
  %s6 = inlined_call_operand.vmem [shape: f32[1,32], index: 6, kind: input, shape index: {}]
  %s7 = inlined_call_operand.hbm [shape: f32[2,8], index: 7, kind: output, shape index: {}]
  %s8 = sld [smem:[#allocation0]]
  $region50: #{tpu_custom_call.1} parent=0
    _
  %s10 = ssub.s32 1, %s8
  %s11 = scalar_select 0, %s10, %s8
  $region1: #{tpu_custom_call.1} parent=0
    #allocation2 [shape = 'u8[8192]{0}', space=vmem, size = 0x2000, scoped, tag = 'input window, operand 1, single buffered']
    #allocation3 [shape = 's32[1]{0}', space=sflag, size = 0x4, scoped, tag = 'scoped memory for tpu_custom_call.1']
    #allocation4 [shape = 's32[1]{0}', space=sflag, size = 0x4, scoped, tag = 'scoped memory for tpu_custom_call.1']
    #allocation5 [shape = 'u8[16384]{0}', space=vmem, size = 0x4000, scoped, tag = 'input window, operand 3, single buffered']
    #allocation6 [shape = 's32[1]{0}', space=sflag, size = 0x4, scoped, tag = 'scoped memory for tpu_custom_call.1']
    #allocation7 [shape = 'u8[16384]{0}', space=vmem, size = 0x4000, scoped, tag = 'input window, operand 4, single buffered']
    #allocation8 [shape = 'u8[1024]{0}', space=vmem, size = 0x400, scoped, tag = 'output window, operand 0, single buffered']
    %12 = vsyncpa [#allocation3], 0
    %13 = vsyncpa [#allocation6], 0
    %14 = vsyncpa [#allocation4], 0
    // Predicated region
    $region2: #{tpu_custom_call.1} parent=1 // pred_check
      _
    $region3: #{tpu_custom_call.1} parent=1 // pred_check_branch
      %16 = sbr.rel (0) target = $region5
    $region4: #{tpu_custom_call.1} parent=1 // pred_region
      _
    $region5: #{tpu_custom_call.1} parent=1 // pred_fallthru
      _
    // Predicated region
    $region6: #{tpu_custom_call.1} parent=1 // pred_check
      _
    $region7: #{tpu_custom_call.1} parent=1 // pred_check_branch
      %18 = sbr.rel (0) target = $region9
    $region8: #{tpu_custom_call.1} parent=1 // pred_region
      %s20 = ssub.s32 256, 256
      %21 = vsyncadd [#allocation3], %s20
      %s22 = sshll.u32 [#allocation2], 4
      %s23 = int_to_ptr.vmem [resolvable:$true] %s22
      %28 = dma.hbm_to_vmem [thread:$0]  %s1, 256, %s23, [#allocation3], 128, 128, 8
    $region9: #{tpu_custom_call.1} parent=1 // pred_fallthru
      _
    // Predicated region
    $region10: #{tpu_custom_call.1} parent=1 // pred_check
      _
    $region11: #{tpu_custom_call.1} parent=1 // pred_check_branch
      %30 = sbr.rel (0) target = $region13
    $region12: #{tpu_custom_call.1} parent=1 // pred_region
      _
    $region13: #{tpu_custom_call.1} parent=1 // pred_fallthru
      _
    // Predicated region
    $region14: #{tpu_custom_call.1} parent=1 // pred_check
      _
    $region15: #{tpu_custom_call.1} parent=1 // pred_check_branch
      %32 = sbr.rel (0) target = $region17
    $region16: #{tpu_custom_call.1} parent=1 // pred_region
      %s34 = ssub.s32 512, 512
      %35 = vsyncadd [#allocation6], %s34
      %s36 = sshll.u32 [#allocation5], 4
      %s37 = int_to_ptr.vmem [resolvable:$true] %s36
      %42 = dma.hbm_to_vmem [thread:$0]  %s3, 512, %s37, [#allocation6], 128, 128, 8
    $region17: #{tpu_custom_call.1} parent=1 // pred_fallthru
      _
    // Predicated region
    $region18: #{tpu_custom_call.1} parent=1 // pred_check
      _
    $region19: #{tpu_custom_call.1} parent=1 // pred_check_branch
      %44 = sbr.rel (0) target = $region21
    $region20: #{tpu_custom_call.1} parent=1 // pred_region
      %s46 = ssub.s32 512, 512
      %47 = vsyncadd [#allocation6], %s46
      %s48 = sshll.u32 [#allocation7], 4
      %s49 = int_to_ptr.vmem [resolvable:$true] %s48
      %54 = dma.hbm_to_vmem [thread:$0]  %s4, 512, %s49, [#allocation6], 128, 128, 8
    $region21: #{tpu_custom_call.1} parent=1 // pred_fallthru
      _
    // Predicated region
    $region22: #{tpu_custom_call.1} parent=1 // pred_check
      _
    $region23: #{tpu_custom_call.1} parent=1 // pred_check_branch
      %56 = sbr.rel (0) target = $region25
    $region24: #{tpu_custom_call.1} parent=1 // pred_region
      _
    $region25: #{tpu_custom_call.1} parent=1 // pred_fallthru
      _
    // Predicated region
    $region26: #{tpu_custom_call.1} parent=1 // pred_check
      _
    $region27: #{tpu_custom_call.1} parent=1 // pred_check_branch
      %58 = sbr.rel (0) target = $region29
    $region28: #{tpu_custom_call.1} parent=1 // pred_region
      _
    $region29: #{tpu_custom_call.1} parent=1 // pred_fallthru
      _
    // Predicated region
    $region30: #{tpu_custom_call.1} parent=1 // pred_check
      _
    $region31: #{tpu_custom_call.1} parent=1 // pred_check_branch
      %60 = sbr.rel (0) target = $region33
    $region32: #{tpu_custom_call.1} parent=1 // pred_region
      %61 = dma.done [#allocation3], 256
    $region33: #{tpu_custom_call.1} parent=1 // pred_fallthru
      _
    // Predicated region
    $region34: #{tpu_custom_call.1} parent=1 // pred_check
      _
    $region35: #{tpu_custom_call.1} parent=1 // pred_check_branch
      %63 = sbr.rel (0) target = $region37
    $region36: #{tpu_custom_call.1} parent=1 // pred_region
      %64 = dma.done [#allocation6], 512
    $region37: #{tpu_custom_call.1} parent=1 // pred_fallthru
      _
    // Predicated region
    $region38: #{tpu_custom_call.1} parent=1 // pred_check
      _
    $region39: #{tpu_custom_call.1} parent=1 // pred_check_branch
      %66 = sbr.rel (0) target = $region41
    $region40: #{tpu_custom_call.1} parent=1 // pred_region
      %67 = dma.done [#allocation6], 512
    $region41: #{tpu_custom_call.1} parent=1 // pred_fallthru
      _
    %v68 = vld [vmem:[%s0] sm:$0x3]
    %v69 = vld [vmem:[#allocation5] sm:$0xff]
    %v70 = vld [vmem:[#allocation5 + $0x8] sm:$0xff]
    %v71 = vld [vmem:[#allocation5 + $0x10] sm:$0xff]
    %v72 = vld [vmem:[#allocation5 + $0x18] sm:$0xff]
    %v73 = vld [vmem:[%s5] sm:$0x1]
    %v75 = vlaneseq
    %v76 = vshrl.u32 %v75, 7
    %v77 = vsub.s32 0, %v76
    %v78 = vrot.slane %v73, %v77
    %vm80 = vcmask 523264
    %v82 = vsel %vm80, %v68, 0
    %v85 = vsel %vm80, %v69, 0
    %v88 = vsel %vm80, %v70, 0
    %v91 = vsel %vm80, %v71, 0
    %v94 = vsel %vm80, %v72, 0
    %96 = vmatprep.subr.mxu0 0.0
    %97 = vmatpush1.xpose.msra.mxu0 %v85
    %98 = vmatprep.subr.mxu0 0.0
    %99 = vmatpush1.xpose.msra.mxu0 %v88
    %100 = vmatprep.subr.mxu0 0.0
    %101 = vmatpush1.xpose.msra.mxu0 %v91
    %102 = vmatprep.subr.mxu0 0.0
    %103 = vmatpush1.xpose.msra.mxu0 %v94
    %104 = vmatprep.subr.mxu0 0.0
    %105 = vmatpush1.xpose.msra.mxu0 0.0
    %106 = vmatprep.subr.mxu0 0.0
    %107 = vmatpush1.xpose.msra.mxu0 0.0
    %108 = vmatprep.subr.mxu0 0.0
    %109 = vmatpush1.xpose.msra.mxu0 0.0
    %110 = vmatprep.subr.mxu0 0.0
    %111 = vmatpush1.xpose.msra.mxu0 0.0
    %112 = vmatprep.subr.mxu0 0.0
    %113 = vmatpush1.xpose.msra.mxu0 0.0
    %114 = vmatprep.subr.mxu0 0.0
    %115 = vmatpush1.xpose.msra.mxu0 0.0
    %116 = vmatprep.subr.mxu0 0.0
    %117 = vmatpush1.xpose.msra.mxu0 0.0
    %118 = vmatprep.subr.mxu0 0.0
    %119 = vmatpush1.xpose.msra.mxu0 0.0
    %120 = vmatprep.subr.mxu0 0.0
    %121 = vmatpush1.xpose.msra.mxu0 0.0
    %122 = vmatprep.subr.mxu0 0.0
    %123 = vmatpush1.xpose.msra.mxu0 0.0
    %124 = vmatprep.subr.mxu0 0.0
    %125 = vmatpush1.xpose.msra.mxu0 0.0
    %126 = vmatprep.subr.mxu0 0.0
    %127 = vmatpush1.xpose.msra.mxu0 0.0
    %128 = vmatprep.subr.mxu0 0.0
    %129 = vmatpush1.xpose.msra.mxu0 0.0
    %130 = vmatprep.subr.mxu0 0.0
    %131 = vmatpush1.xpose.msra.mxu0 0.0
    %132 = vmatprep.subr.mxu0 0.0
    %133 = vmatpush1.xpose.msra.mxu0 0.0
    %134 = vmatprep.subr.mxu0 0.0
    %135 = vmatpush1.xpose.msra.mxu0 0.0
    %136 = vmatprep.subr.mxu0 0.0
    %137 = vmatpush1.xpose.msra.mxu0 0.0
    %138 = vmatprep.subr.mxu0 0.0
    %139 = vmatpush1.xpose.msra.mxu0 0.0
    %140 = vmatprep.subr.mxu0 0.0
    %141 = vmatpush1.xpose.msra.mxu0 0.0
    %142 = vmatprep.subr.mxu0 0.0
    %143 = vmatpush1.xpose.msra.mxu0 0.0
    %144 = vmatprep.subr.mxu0 0.0
    %145 = vmatpush1.xpose.msra.mxu0 0.0
    %146 = vmatprep.subr.mxu0 0.0
    %147 = vmatpush1.xpose.msra.mxu0 0.0
    %148 = vmatprep.subr.mxu0 0.0
    %149 = vmatpush1.xpose.msra.mxu0 0.0
    %150 = vmatprep.subr.mxu0 0.0
    %151 = vmatpush1.xpose.msra.mxu0 0.0
    %152 = vmatprep.subr.mxu0 0.0
    %153 = vmatpush1.xpose.msra.mxu0 0.0
    %154 = vmatprep.subr.mxu0 0.0
    %155 = vmatpush1.xpose.msra.mxu0 0.0
    %156 = vmatprep.subr.mxu0 0.0
    %157 = vmatpush1.xpose.msra.mxu0 0.0
    %158 = vmatprep.subr.mxu0 0.0
    %159 = vmatpush1.xpose.msra.mxu0 0.0
    %160 = vmatprep.mubr.f32.mxu0 0.0
    %161 = vmatmul.mubr.f32.gmra.mrb[0].mxu0 %v82
    %v162 = vpop.f32.mrb[0].mxu0
    %v163 = vadd.f32 %v78, %v162
    %v164 = vpop.f32.mrb[0].mxu0
    %165 = vdwg.mxu0
    %v166 = vld [vmem:[#allocation2] sm:$0xff]
    %v167 = vld [vmem:[#allocation2 + $0x8] sm:$0xff]
    %v168 = vld [vmem:[#allocation7] sm:$0xff]
    %v169 = vld [vmem:[#allocation7 + $0x8] sm:$0xff]
    %v170 = vld [vmem:[#allocation7 + $0x10] sm:$0xff]
    %v171 = vld [vmem:[#allocation7 + $0x18] sm:$0xff]
    %vm172 = vcmask 261120
    %v174 = vsel %vm172, %v166, 0
    %v177 = vsel %vm172, %v167, 0
    %v180 = vsel %vm172, %v168, 0
    %v183 = vsel %vm172, %v169, 0
    %v186 = vsel %vm172, %v170, 0
    %v189 = vsel %vm172, %v171, 0
    %191 = vmatprep.subr.mxu0 0.0
    %192 = vmatpush1.xpose.msra.mxu0 %v180
    %193 = vmatprep.subr.mxu0 0.0
    %194 = vmatpush1.xpose.msra.mxu0 %v183
    %195 = vmatprep.subr.mxu0 0.0
    %196 = vmatpush1.xpose.msra.mxu0 %v186
    %197 = vmatprep.subr.mxu0 0.0
    %198 = vmatpush1.xpose.msra.mxu0 %v189
    %199 = vmatprep.subr.mxu0 0.0
    %200 = vmatpush1.xpose.msra.mxu0 0.0
    %201 = vmatprep.subr.mxu0 0.0
    %202 = vmatpush1.xpose.msra.mxu0 0.0
    %203 = vmatprep.subr.mxu0 0.0
    %204 = vmatpush1.xpose.msra.mxu0 0.0
    %205 = vmatprep.subr.mxu0 0.0
    %206 = vmatpush1.xpose.msra.mxu0 0.0
    %207 = vmatprep.subr.mxu0 0.0
    %208 = vmatpush1.xpose.msra.mxu0 0.0
    %209 = vmatprep.subr.mxu0 0.0
    %210 = vmatpush1.xpose.msra.mxu0 0.0
    %211 = vmatprep.subr.mxu0 0.0
    %212 = vmatpush1.xpose.msra.mxu0 0.0
    %213 = vmatprep.subr.mxu0 0.0
    %214 = vmatpush1.xpose.msra.mxu0 0.0
    %215 = vmatprep.subr.mxu0 0.0
    %216 = vmatpush1.xpose.msra.mxu0 0.0
    %217 = vmatprep.subr.mxu0 0.0
    %218 = vmatpush1.xpose.msra.mxu0 0.0
    %219 = vmatprep.subr.mxu0 0.0
    %220 = vmatpush1.xpose.msra.mxu0 0.0
    %221 = vmatprep.subr.mxu0 0.0
    %222 = vmatpush1.xpose.msra.mxu0 0.0
    %223 = vmatprep.subr.mxu0 0.0
    %224 = vmatpush1.xpose.msra.mxu0 0.0
    %225 = vmatprep.subr.mxu0 0.0
    %226 = vmatpush1.xpose.msra.mxu0 0.0
    %227 = vmatprep.subr.mxu0 0.0
    %228 = vmatpush1.xpose.msra.mxu0 0.0
    %229 = vmatprep.subr.mxu0 0.0
    %230 = vmatpush1.xpose.msra.mxu0 0.0
    %231 = vmatprep.subr.mxu0 0.0
    %232 = vmatpush1.xpose.msra.mxu0 0.0
    %233 = vmatprep.subr.mxu0 0.0
    %234 = vmatpush1.xpose.msra.mxu0 0.0
    %235 = vmatprep.subr.mxu0 0.0
    %236 = vmatpush1.xpose.msra.mxu0 0.0
    %237 = vmatprep.subr.mxu0 0.0
    %238 = vmatpush1.xpose.msra.mxu0 0.0
    %239 = vmatprep.subr.mxu0 0.0
    %240 = vmatpush1.xpose.msra.mxu0 0.0
    %241 = vmatprep.subr.mxu0 0.0
    %242 = vmatpush1.xpose.msra.mxu0 0.0
    %243 = vmatprep.subr.mxu0 0.0
    %244 = vmatpush1.xpose.msra.mxu0 0.0
    %245 = vmatprep.subr.mxu0 0.0
    %246 = vmatpush1.xpose.msra.mxu0 0.0
    %247 = vmatprep.subr.mxu0 0.0
    %248 = vmatpush1.xpose.msra.mxu0 0.0
    %249 = vmatprep.subr.mxu0 0.0
    %250 = vmatpush1.xpose.msra.mxu0 0.0
    %251 = vmatprep.subr.mxu0 0.0
    %252 = vmatpush1.xpose.msra.mxu0 0.0
    %253 = vmatprep.subr.mxu0 0.0
    %254 = vmatpush1.xpose.msra.mxu0 0.0
    %255 = vmatprep.mubr.f32.mxu0 0.0
    %256 = vmatmul.mubr.f32.gmra.mrb[0].mxu0 %v174
    %v257 = vpop.f32.mrb[0].mxu0
    %v258 = vadd.f32 0.0, %v257
    %v259 = vpop.f32.mrb[0].mxu0
    %260 = vmatprep.mubr.f32.mxu0 0.0
    %261 = vmatmul.mubr.f32.gmra.mrb[0].mxu0 %v177
    %v262 = vpop.f32.mrb[0].mxu0
    %v263 = vadd.f32 0.0, %v262
    %v264 = vpop.f32.mrb[0].mxu0
    %265 = vdwg.mxu0
    %v268 = vunpack.c.l.s4 1966171168
    %v269 = vunpack.c.0.s8 %v268
    %v270 = vlaneseq
    %v271 = vshrl.u32 %v270, 7
    %v272 = vsub.s32 %v269, %v271
    %v273 = vrot.slane %v163, %v272
    %v274 = vcombine.high %v273, %v273
    %v276 = vunpack.c.l.s4 1966171168
    %v277 = vunpack.c.0.s8 %v276
    %v278 = vlaneseq
    %v279 = vshrl.u32 %v278, 7
    %v280 = vsub.s32 %v277, %v279
    %v281 = vrot.slane %v273, %v280
    %v283 = vunpack.c.l.s4 1966171168
    %v284 = vunpack.c.0.s8 %v283
    %v285 = vlaneseq
    %v286 = vshrl.u32 %v285, 7
    %v287 = vsub.s32 %v284, %v286
    %v288 = vrot.slane %v274, %v287
    %v289 = vlaneseq
    %v290 = vshrl.u32 %v289, 7
    %v291 = vsub.s32 0, %v290
    %v292 = vrot.slane %v281, %v291
    %v293 = vlaneseq
    %v294 = vshrl.u32 %v293, 7
    %v295 = vsub.s32 0, %v294
    %v296 = vrot.slane %v288, %v295
    %v299 = vadd.f32 %v258, %v292
    %v300 = vadd.f32 %v263, %v296
    %v301 = vtanh.pop %v299
    %v302 = vtanh.pop %v300
    %v303 = vld [vmem:[%s6] sm:$0x1]
    %v305 = vlaneseq
    %v306 = vshrl.u32 %v305, 7
    %v307 = vsub.s32 0, %v306
    %v308 = vrot.slane %v303, %v307
    %v310 = vmul.f32 %v301, %v308
    %v311 = vmul.f32 %v302, %v308
    %v312 = vsel %vm172, %v310, 0.0
    %313 = vadd.xlane.f32.xlu0 %v312
    %v314 = vpop.xlane.xlu0 %313
    %v315 = vsel %vm172, %v311, 0.0
    %316 = vadd.xlane.f32.xlu0 %v315
    %v317 = vpop.xlane.xlu0 %316
    %v318 = vlaneseq
    %v319 = vand.u32 %v318, 127
    %v320 = vld [vmem:[%s2] sm:$0x3]
    %321 = vset.pattern.permute.xlu0 0
    %322 = vperm.xlu0 %321, %v320
    %v323 = vpop.permute.xlu0 %322
    %vm324 = vcmp.lt.s32.totalorder %v319, %v323
    %v327 = vlaneseq
    %v328 = vshrl.u32 %v327, 7
    %v329 = vsub.s32 %v319, %v328
    %v330 = vrot.slane %v314, %v329
    %v331 = vlaneseq
    %v332 = vshrl.u32 %v331, 7
    %v333 = vsub.s32 %v319, %v332
    %v334 = vrot.slane %v317, %v333
    %vm335 = vcmask 1041409
    %v336 = vsel %vm335, %v334, %v330
    %v338 = vsel %vm324, %v336, -inf
    %vm339 = vcmask 58368
    %v340 = vsel %vm339, %v338, -inf
    %341 = vmax.xlane.f32.xlu0 %v340
    %v342 = vpop.xlane.xlu0 %341
    %v343 = vsub.f32 %v338, %v342
    %v344 = vmul.f32 %v343, 1.442695
    %v345 = vpow.pop %v344
    %v346 = vsel %vm339, %v345, 0.0
    %347 = vadd.xlane.f32.xlu0 %v346
    %v348 = vpop.xlane.xlu0 %347
    %v349 = vrcp.pop %v348
    %v350 = vmul.f32 %v345, %v349
    %351 = vst.msk [vmem:[#allocation8] sm:$0x3] %vm339, %v350
    // Predicated region
    $region42: #{tpu_custom_call.1} parent=1 // pred_check
      _
    $region43: #{tpu_custom_call.1} parent=1 // pred_check_branch
      %353 = sbr.rel (0) target = $region45
    $region44: #{tpu_custom_call.1} parent=1 // pred_region
      %s355 = ssub.s32 32, 32
      %356 = vsyncadd [#allocation4], %s355
      %s358 = sshll.u32 [#allocation8], 4
      %s359 = int_to_ptr.vmem [resolvable:$true] %s358
      %361 = dma.vmem_to_hbm [thread:$0]  %s359, 32, %s7, [#allocation4]
    $region45: #{tpu_custom_call.1} parent=1 // pred_fallthru
      _
    // Predicated region
    $region46: #{tpu_custom_call.1} parent=1 // pred_check
      _
    $region47: #{tpu_custom_call.1} parent=1 // pred_check_branch
      %363 = sbr.rel (0) target = $region49
    $region48: #{tpu_custom_call.1} parent=1 // pred_region
      %364 = dma.done [#allocation4], 32
    $region49: #{tpu_custom_call.1} parent=1 // pred_fallthru
      _
    %365 = vsyncpa [#allocation3], 1
    %366 = vsyncpa [#allocation6], 1
    %367 = vsyncpa [#allocation4], 1

</llo_original>
